<compile_context>
chip_gen: v7x
topology: tpu7x:2x2x1
jax: 0.10.0
libtpu: 0.0.40
codegen_flags: <defaults>
</compile_context>

<pallas_src>
import functools

import jax
import jax.numpy as jnp
from jax import lax
from jax.experimental import pallas as pl
from jax.experimental.pallas import tpu as pltpu

EPS = 1e-5
LANE = 128


def _round_up(n, m):
    return ((n + m - 1) // m) * m


def _pick_batch_tile(batch, max_tile=2048):
    """Largest multiple-of-8 divisor of `batch` <= max_tile, capped so that
    there are at least 2 grid steps when batch allows (v7x megacore)."""
    assert batch % 8 == 0, "batch must be a multiple of 8 for (8,128) tiling"
    cap = min(max_tile, batch // 2) if batch >= 16 else batch
    cap -= cap % 8
    cap = max(cap, 8)
    tb = cap
    while batch % tb != 0 or tb % 8 != 0:
        tb -= 8
    return tb


# ---------------------------------------------------------------------------
# Kernel
# ---------------------------------------------------------------------------
def ialnet_main_kernel(x1_ref, x2_ref, w1a_ref, w1b_ref, bb1_ref,
                       w2_ref, epad_ref, bb2_ref, w3_ref, bb3_ref,
                       y_ref, psum_ref, psq_ref):
    """(BN1-folded) fc1 + fc2(+x1 residual) + fc3 for one batch tile.

    Stores the pre-BN2 activations lane-dense in bf16 and emits per-tile
    sum / sum-of-squares partials (from the f32 values) so the full-batch
    BN2 statistics can be finalized outside the tiled grid.
    """
    x1 = x1_ref[...].astype(jnp.bfloat16)   # (TB, O)
    x2 = x2_ref[...].astype(jnp.bfloat16)   # (TB, I2)

    # fc1 with BN1 pre-folded into the weights (split-K over x1 | x2).
    h = jnp.dot(x1, w1a_ref[...], preferred_element_type=jnp.float32)
    h = h + jnp.dot(x2, w1b_ref[...], preferred_element_type=jnp.float32)
    h = h + bb1_ref[...]                    # (TB, D) f32

    # fc2 + residual x1 (identity-embedded into the padded lane space by MXU).
    y = jnp.dot(h.astype(jnp.bfloat16), w2_ref[...],
                preferred_element_type=jnp.float32)
    y = y + jnp.dot(x1, epad_ref[...], preferred_element_type=jnp.float32)
    y = y + bb2_ref[...]                    # (TB, Opad) f32, padded lanes 0

    # fc3 (lane-dense Opad x Opad).
    y = jnp.dot(y.astype(jnp.bfloat16), w3_ref[...],
                preferred_element_type=jnp.float32)
    y = y + bb3_ref[...]                    # (TB, Opad) f32

    # Per-tile partials for BN2 (one-pass stats), from the f32 value.
    opad = y.shape[-1]
    s = jnp.sum(y, axis=0, keepdims=True)         # (1, Opad)
    q = jnp.sum(y * y, axis=0, keepdims=True)     # (1, Opad)
    psum_ref[...] = jnp.broadcast_to(s, (1, 8, opad))
    psq_ref[...] = jnp.broadcast_to(q, (1, 8, opad))

    # Lane-dense bf16 store of the pre-BN2 activations.
    y_ref[...] = y.astype(jnp.bfloat16)


# ---------------------------------------------------------------------------
# Parameter preparation
# ---------------------------------------------------------------------------
def init_params(key, teacheroutputsize, input_size2, output_size):
    """f32 params; Linear weights stored pre-transposed as (in, out)."""
    D = teacheroutputsize + input_size2
    O = output_size
    ks = jax.random.split(key, 6)
    s1 = 1.0 / jnp.sqrt(D)
    s2 = 1.0 / jnp.sqrt(O)
    return dict(
        g1=jnp.ones((1, D), jnp.float32),
        b1=jnp.zeros((1, D), jnp.float32),
        w1=jax.random.uniform(ks[0], (D, D), jnp.float32, -s1, s1),
        bb1=jax.random.uniform(ks[1], (1, D), jnp.float32, -s1, s1),
        w2=jax.random.uniform(ks[2], (D, O), jnp.float32, -s1, s1),
        bb2=jax.random.uniform(ks[3], (1, O), jnp.float32, -s1, s1),
        w3=jax.random.uniform(ks[4], (O, O), jnp.float32, -s2, s2),
        bb3=jax.random.uniform(ks[5], (1, O), jnp.float32, -s2, s2),
        g2=jnp.ones((1, O), jnp.float32),
        b2=jnp.zeros((1, O), jnp.float32),
    )


def prepare_params(params, teacheroutputsize, input_size2, output_size):
    """Zero-pad the O dim to 128 lanes for lane-dense fc2/fc3 output and store
    matmul weights in bf16.  Biases stay f32.  (fc1 weights are folded with
    BN1 per call, so they are not prepared here.)"""
    assert teacheroutputsize == output_size, \
        "fc2(x) + x1 requires output_size == teacheroutputsize"
    O, I2 = teacheroutputsize, input_size2
    D = O + I2
    Opad = _round_up(max(O, LANE), LANE)

    w2p = jnp.zeros((D, Opad), jnp.float32).at[:, :O].set(params["w2"])
    w3p = jnp.zeros((Opad, Opad), jnp.float32).at[:O, :O].set(params["w3"])
    bb2p = jnp.zeros((1, Opad), jnp.float32).at[:, :O].set(params["bb2"])
    bb3p = jnp.zeros((1, Opad), jnp.float32).at[:, :O].set(params["bb3"])
    # Identity embedding of x1 into the lane-dense 128-lane output space: the
    # fc2 residual becomes a cheap extra MXU dot instead of a wrapper-side
    # HBM pad pass or an in-kernel pad/scatter.
    epad = jnp.zeros((O, Opad), jnp.float32).at[:, :O].set(jnp.eye(O))

    return dict(
        Opad=Opad,
        w2=w2p.astype(jnp.bfloat16), bb2=bb2p,
        w3=w3p.astype(jnp.bfloat16), bb3=bb3p,
        epad=epad.astype(jnp.bfloat16),
    )


def _fold_bn1(x1, x2, params):
    """Full-batch (training-mode) BN1 statistics, folded into fc1.

    Returns bf16 weight halves w1a (O, D), w1b (I2, D) and the f32 folded
    bias (1, D).  All math is on (1, D) vectors and a 32x32 matrix.
    """
    O = x1.shape[1]
    g1, b1, w1, bb1 = params["g1"], params["b1"], params["w1"], params["bb1"]

    mua = jnp.mean(x1, axis=0, keepdims=True)
    vara = jnp.maximum(jnp.mean(x1 * x1, axis=0, keepdims=True) - mua * mua, 0.0)
    sa = g1[:, :O] * lax.rsqrt(vara + EPS)
    ha = b1[:, :O] - mua * sa

    mub = jnp.mean(x2, axis=0, keepdims=True)
    varb = jnp.maximum(jnp.mean(x2 * x2, axis=0, keepdims=True) - mub * mub, 0.0)
    sb = g1[:, O:] * lax.rsqrt(varb + EPS)
    hb = b1[:, O:] - mub * sb

    w1a = (sa[0][:, None] * w1[:O]).astype(jnp.bfloat16)   # (O, D)
    w1b = (sb[0][:, None] * w1[O:]).astype(jnp.bfloat16)   # (I2, D)
    bb1f = bb1 + ha @ w1[:O] + hb @ w1[O:]                 # (1, D) f32
    return w1a, w1b, bb1f


# ---------------------------------------------------------------------------
# Forward
# ---------------------------------------------------------------------------
def ialnet_forward(x1, x2, params, prep):
    B, O = x1.shape
    I2 = x2.shape[1]
    D = O + I2
    Opad = prep["Opad"]
    TB = _pick_batch_tile(B)
    NB = B // TB

    # BN1 full-batch statistics need the FULL batch, so they cannot live
    # inside a batch-tiled grid step: cheap one-pass JAX pre-reduction, folded
    # into fc1's weights/bias (exact algebra, tiny matrices).
    w1a, w1b, bb1f = _fold_bn1(x1, x2, params)

    row = lambda i: (i, 0)
    const2 = lambda i: (0, 0)
    row3 = lambda i: (i, 0, 0)

    flops = 2 * B * (O * D + I2 * D + D * Opad + O * Opad + Opad * Opad)
    bytes_accessed = (
        4 * B * (O + I2)                                   # x1, x2 reads (f32)
        + 2 * B * Opad                                     # y3 write (bf16)
        + 2 * 4 * NB * 8 * Opad                            # BN2 partials
        + 2 * (O * D + I2 * D + D * Opad + O * Opad + Opad * Opad)  # bf16 weights
        + 4 * (D + 2 * Opad))                              # biases

    y3, psum, psq = pl.pallas_call(
        ialnet_main_kernel,
        out_shape=(
            jax.ShapeDtypeStruct((B, Opad), jnp.bfloat16),
            jax.ShapeDtypeStruct((NB, 8, Opad), jnp.float32),
            jax.ShapeDtypeStruct((NB, 8, Opad), jnp.float32),
        ),
        grid=(NB,),
        in_specs=[
            pl.BlockSpec((TB, O), row),           # x1 (unpadded)
            pl.BlockSpec((TB, I2), row),          # x2
            pl.BlockSpec((O, D), const2),         # w1a (bf16, BN1-folded, resident)
            pl.BlockSpec((I2, D), const2),        # w1b (bf16, BN1-folded, resident)
            pl.BlockSpec((1, D), const2),         # folded fc1 bias (f32)
            pl.BlockSpec((D, Opad), const2),      # w2 (bf16, resident)
            pl.BlockSpec((O, Opad), const2),      # identity embed for residual (bf16)
            pl.BlockSpec((1, Opad), const2),      # fc2 bias
            pl.BlockSpec((Opad, Opad), const2),   # w3 (bf16, resident)
            pl.BlockSpec((1, Opad), const2),      # fc3 bias
        ],
        out_specs=(
            pl.BlockSpec((TB, Opad), row),        # pre-BN2 activations (bf16)
            pl.BlockSpec((1, 8, Opad), row3),     # per-tile sum
            pl.BlockSpec((1, 8, Opad), row3),     # per-tile sum of squares
        ),
        compiler_params=pltpu.CompilerParams(
            dimension_semantics=("parallel",),
            vmem_limit_bytes=32 * 1024 * 1024),
        cost_estimate=pl.CostEstimate(
            flops=flops, transcendentals=0, bytes_accessed=bytes_accessed),
    )(x1, x2, w1a, w1b, bb1f,
      prep["w2"], prep["epad"], prep["bb2"], prep["w3"], prep["bb3"])

    # BN2 finalize from the per-tile partials (tiny) + apply + lane slice:
    # a single fused XLA elementwise pass over y3 (no second Pallas kernel,
    # no separate slice copy).
    total = jnp.sum(psum[:, 0, :O], axis=0)
    totsq = jnp.sum(psq[:, 0, :O], axis=0)
    mu2 = total / B
    var2 = jnp.maximum(totsq / B - mu2 * mu2, 0.0)
    s2 = params["g2"][0] * lax.rsqrt(var2 + EPS)          # (O,)
    h2 = params["b2"][0] - mu2 * s2                       # (O,)
    # x.squeeze(-1) is a no-op for output_size > 1.
    return y3[:, :O].astype(jnp.float32) * s2 + h2


# ---------------------------------------------------------------------------
# References
# ---------------------------------------------------------------------------
def ialnet_reference_f32(x1, x2, params):
    """Pure-f32 JAX reference mirroring the PyTorch forward exactly."""
    x = jnp.concatenate([x1, x2], axis=1)
    mu = x.mean(0, keepdims=True)
    var = ((x - mu) ** 2).mean(0, keepdims=True)
    x = (x - mu) * lax.rsqrt(var + EPS) * params["g1"] + params["b1"]
    x = x @ params["w1"] + params["bb1"]
    x = x @ params["w2"] + params["bb2"] + x1
    x = x @ params["w3"] + params["bb3"]
    mu2 = x.mean(0, keepdims=True)
    var2 = ((x - mu2) ** 2).mean(0, keepdims=True)
    return (x - mu2) * lax.rsqrt(var2 + EPS) * params["g2"] + params["b2"]


def ialnet_reference_mirrored(x1, x2, params, prep):
    """JAX reference with the same BN1 fold / bf16 casts / padding / residual
    embedding / bf16 intermediate store as the kernel."""
    B, O = x1.shape
    w1a, w1b, bb1f = _fold_bn1(x1, x2, params)
    x1b = x1.astype(jnp.bfloat16)
    x2b = x2.astype(jnp.bfloat16)
    h = (jnp.dot(x1b, w1a, preferred_element_type=jnp.float32)
         + jnp.dot(x2b, w1b, preferred_element_type=jnp.float32) + bb1f)
    y = (jnp.dot(h.astype(jnp.bfloat16), prep["w2"],
                 preferred_element_type=jnp.float32)
         + jnp.dot(x1b, prep["epad"], preferred_element_type=jnp.float32)
         + prep["bb2"])
    y = (jnp.dot(y.astype(jnp.bfloat16), prep["w3"],
                 preferred_element_type=jnp.float32)
         + prep["bb3"])
    mu2 = jnp.mean(y[:, :O], axis=0)
    var2 = jnp.maximum(jnp.mean(y[:, :O] ** 2, axis=0) - mu2 * mu2, 0.0)
    s2 = params["g2"][0] * lax.rsqrt(var2 + EPS)
    h2 = params["b2"][0] - mu2 * s2
    ybf = y.astype(jnp.bfloat16)          # mirror the bf16 HBM store
    return ybf[:, :O].astype(jnp.float32) * s2 + h2


# ---------------------------------------------------------------------------
if __name__ == "__main__":
    B = 64                    # small test batch (multiple of 8 -> 2 grid tiles)
    teacheroutputsize = 16
    input_size2 = 16
    output_size = 16          # must equal teacheroutputsize for fc2(x) + x1

    key = jax.random.PRNGKey(0)
    k1, k2, kp = jax.random.split(key, 3)
    x1 = jax.random.normal(k1, (B, teacheroutputsize), jnp.float32)
    x2 = jax.random.normal(k2, (B, input_size2), jnp.float32)

    params = init_params(kp, teacheroutputsize, input_size2, output_size)
    prep = prepare_params(params, teacheroutputsize, input_size2, output_size)

    fwd = jax.jit(functools.partial(ialnet_forward, params=params, prep=prep))
    out = jax.block_until_ready(fwd(x1, x2))

    ref_mirror = ialnet_reference_mirrored(x1, x2, params, prep)
    ref_f32 = ialnet_reference_f32(x1, x2, params)

    assert out.shape == (B, output_size)
    assert jnp.allclose(out, ref_mirror, atol=1e-2, rtol=1e-2), \
        "mismatch vs bf16-mirrored reference"
    assert jnp.allclose(out, ref_f32, atol=0.15, rtol=0.15), \
        "mismatch vs f32 PyTorch-semantics reference"

    print("KERNEL_OK")
</pallas_src>

<mosaic_0001>
module attributes {stable_mosaic.version = 11 : i64} {
  func.func @ialnet_main_kernel(%arg0: i32, %arg1: memref<32x16xf32, #tpu.memory_space<vmem>>, %arg2: memref<32x16xf32, #tpu.memory_space<vmem>>, %arg3: memref<16x32xbf16, #tpu.memory_space<vmem>>, %arg4: memref<16x32xbf16, #tpu.memory_space<vmem>>, %arg5: memref<1x32xf32, #tpu.memory_space<vmem>>, %arg6: memref<32x128xbf16, #tpu.memory_space<vmem>>, %arg7: memref<16x128xbf16, #tpu.memory_space<vmem>>, %arg8: memref<1x128xf32, #tpu.memory_space<vmem>>, %arg9: memref<128x128xbf16, #tpu.memory_space<vmem>>, %arg10: memref<1x128xf32, #tpu.memory_space<vmem>>, %arg11: memref<32x128xbf16, #tpu.memory_space<vmem>>, %arg12: memref<1x8x128xf32, #tpu.memory_space<vmem>>, %arg13: memref<1x8x128xf32, #tpu.memory_space<vmem>>) attributes {dimension_semantics = [#tpu.dimension_semantics<parallel>], iteration_bounds = array<i64: 2>, scalar_prefetch = 0 : i64, scratch_operands = 0 : i64, tpu.core_type = #tpu.core_type<tc>, window_params = [{transform_indices = @transform_0, window_bounds = array<i64: 32, 16>}, {transform_indices = @transform_1, window_bounds = array<i64: 32, 16>}, {pipeline_mode = #tpu.pipeline_mode<synchronous>, transform_indices = @transform_2, window_bounds = array<i64: 16, 32>}, {pipeline_mode = #tpu.pipeline_mode<synchronous>, transform_indices = @transform_3, window_bounds = array<i64: 16, 32>}, {pipeline_mode = #tpu.pipeline_mode<synchronous>, transform_indices = @transform_4, window_bounds = array<i64: 1, 32>}, {pipeline_mode = #tpu.pipeline_mode<synchronous>, transform_indices = @transform_5, window_bounds = array<i64: 32, 128>}, {pipeline_mode = #tpu.pipeline_mode<synchronous>, transform_indices = @transform_6, window_bounds = array<i64: 16, 128>}, {pipeline_mode = #tpu.pipeline_mode<synchronous>, transform_indices = @transform_7, window_bounds = array<i64: 1, 128>}, {pipeline_mode = #tpu.pipeline_mode<synchronous>, transform_indices = @transform_8, window_bounds = array<i64: 128, 128>}, {pipeline_mode = #tpu.pipeline_mode<synchronous>, transform_indices = @transform_9, window_bounds = array<i64: 1, 128>}, {transform_indices = @transform_10, window_bounds = array<i64: 32, 128>}, {transform_indices = @transform_11, window_bounds = array<i64: 1, 8, 128>}, {transform_indices = @transform_12, window_bounds = array<i64: 1, 8, 128>}]} {
    %c0 = arith.constant 0 : index
    %c0_0 = arith.constant 0 : index
    %0 = vector.load %arg1[%c0, %c0_0] : memref<32x16xf32, #tpu.memory_space<vmem>>, vector<32x16xf32>
    %1 = arith.truncf %0 : vector<32x16xf32> to vector<32x16xbf16>
    %c0_1 = arith.constant 0 : index
    %c0_2 = arith.constant 0 : index
    %2 = vector.load %arg2[%c0_1, %c0_2] : memref<32x16xf32, #tpu.memory_space<vmem>>, vector<32x16xf32>
    %3 = arith.truncf %2 : vector<32x16xf32> to vector<32x16xbf16>
    %c0_3 = arith.constant 0 : index
    %c0_4 = arith.constant 0 : index
    %4 = vector.load %arg3[%c0_3, %c0_4] : memref<16x32xbf16, #tpu.memory_space<vmem>>, vector<16x32xbf16>
    %cst = arith.constant dense<0.000000e+00> : vector<32x32xf32>
    %5 = tpu.matmul %1, %4, %cst {dimension_numbers = #tpu.dot_dimension_numbers<[1], [0], [0], [1], [0, 0, 1, 1], [], []>} : vector<32x16xbf16>, vector<16x32xbf16>, vector<32x32xf32> -> vector<32x32xf32>
    %c0_5 = arith.constant 0 : index
    %c0_6 = arith.constant 0 : index
    %6 = vector.load %arg4[%c0_5, %c0_6] : memref<16x32xbf16, #tpu.memory_space<vmem>>, vector<16x32xbf16>
    %cst_7 = arith.constant dense<0.000000e+00> : vector<32x32xf32>
    %7 = tpu.matmul %3, %6, %cst_7 {dimension_numbers = #tpu.dot_dimension_numbers<[1], [0], [0], [1], [0, 0, 1, 1], [], []>} : vector<32x16xbf16>, vector<16x32xbf16>, vector<32x32xf32> -> vector<32x32xf32>
    %8 = arith.addf %5, %7 : vector<32x32xf32>
    %c0_8 = arith.constant 0 : index
    %c0_9 = arith.constant 0 : index
    %9 = vector.load %arg5[%c0_8, %c0_9] : memref<1x32xf32, #tpu.memory_space<vmem>>, vector<1x32xf32>
    %10 = vector.broadcast %9 : vector<1x32xf32> to vector<32x32xf32>
    %11 = arith.addf %8, %10 : vector<32x32xf32>
    %12 = arith.truncf %11 : vector<32x32xf32> to vector<32x32xbf16>
    %c0_10 = arith.constant 0 : index
    %c0_11 = arith.constant 0 : index
    %13 = vector.load %arg6[%c0_10, %c0_11] : memref<32x128xbf16, #tpu.memory_space<vmem>>, vector<32x128xbf16>
    %cst_12 = arith.constant dense<0.000000e+00> : vector<32x128xf32>
    %14 = tpu.matmul %12, %13, %cst_12 {dimension_numbers = #tpu.dot_dimension_numbers<[1], [0], [0], [1], [0, 0, 1, 1], [], []>} : vector<32x32xbf16>, vector<32x128xbf16>, vector<32x128xf32> -> vector<32x128xf32>
    %c0_13 = arith.constant 0 : index
    %c0_14 = arith.constant 0 : index
    %15 = vector.load %arg7[%c0_13, %c0_14] : memref<16x128xbf16, #tpu.memory_space<vmem>>, vector<16x128xbf16>
    %cst_15 = arith.constant dense<0.000000e+00> : vector<32x128xf32>
    %16 = tpu.matmul %1, %15, %cst_15 {dimension_numbers = #tpu.dot_dimension_numbers<[1], [0], [0], [1], [0, 0, 1, 1], [], []>} : vector<32x16xbf16>, vector<16x128xbf16>, vector<32x128xf32> -> vector<32x128xf32>
    %17 = arith.addf %14, %16 : vector<32x128xf32>
    %c0_16 = arith.constant 0 : index
    %c0_17 = arith.constant 0 : index
    %18 = vector.load %arg8[%c0_16, %c0_17] : memref<1x128xf32, #tpu.memory_space<vmem>>, vector<1x128xf32>
    %19 = vector.broadcast %18 : vector<1x128xf32> to vector<32x128xf32>
    %20 = arith.addf %17, %19 : vector<32x128xf32>
    %21 = arith.truncf %20 : vector<32x128xf32> to vector<32x128xbf16>
    %c0_18 = arith.constant 0 : index
    %c0_19 = arith.constant 0 : index
    %22 = vector.load %arg9[%c0_18, %c0_19] : memref<128x128xbf16, #tpu.memory_space<vmem>>, vector<128x128xbf16>
    %cst_20 = arith.constant dense<0.000000e+00> : vector<32x128xf32>
    %23 = tpu.matmul %21, %22, %cst_20 {dimension_numbers = #tpu.dot_dimension_numbers<[1], [0], [0], [1], [0, 0, 1, 1], [], []>} : vector<32x128xbf16>, vector<128x128xbf16>, vector<32x128xf32> -> vector<32x128xf32>
    %c0_21 = arith.constant 0 : index
    %c0_22 = arith.constant 0 : index
    %24 = vector.load %arg10[%c0_21, %c0_22] : memref<1x128xf32, #tpu.memory_space<vmem>>, vector<1x128xf32>
    %25 = vector.broadcast %24 : vector<1x128xf32> to vector<32x128xf32>
    %26 = arith.addf %23, %25 : vector<32x128xf32>
    %cst_23 = arith.constant dense<0.000000e+00> : vector<128xf32>
    %27 = vector.multi_reduction <add>, %26, %cst_23 [0] : vector<32x128xf32> to vector<128xf32>
    %28 = vector.shape_cast %27 : vector<128xf32> to vector<1x128xf32>
    %29 = arith.mulf %26, %26 : vector<32x128xf32>
    %cst_24 = arith.constant dense<0.000000e+00> : vector<128xf32>
    %30 = vector.multi_reduction <add>, %29, %cst_24 [0] : vector<32x128xf32> to vector<128xf32>
    %31 = vector.shape_cast %30 : vector<128xf32> to vector<1x128xf32>
    %32 = vector.shape_cast %28 : vector<1x128xf32> to vector<1x1x128xf32>
    %33 = vector.broadcast %32 : vector<1x1x128xf32> to vector<1x8x128xf32>
    %c0_25 = arith.constant 0 : index
    %c0_26 = arith.constant 0 : index
    %c0_27 = arith.constant 0 : index
    %34 = vector.load %arg12[%c0_25, %c0_26, %c0_27] : memref<1x8x128xf32, #tpu.memory_space<vmem>>, vector<1x8x128xf32>
    tpu.vector_store %arg12[%c0_25, %c0_26, %c0_27], %33 {strides = array<i32>} : memref<1x8x128xf32, #tpu.memory_space<vmem>>, vector<1x8x128xf32>,
    %35 = vector.shape_cast %31 : vector<1x128xf32> to vector<1x1x128xf32>
    %36 = vector.broadcast %35 : vector<1x1x128xf32> to vector<1x8x128xf32>
    %c0_28 = arith.constant 0 : index
    %c0_29 = arith.constant 0 : index
    %c0_30 = arith.constant 0 : index
    %37 = vector.load %arg13[%c0_28, %c0_29, %c0_30] : memref<1x8x128xf32, #tpu.memory_space<vmem>>, vector<1x8x128xf32>
    tpu.vector_store %arg13[%c0_28, %c0_29, %c0_30], %36 {strides = array<i32>} : memref<1x8x128xf32, #tpu.memory_space<vmem>>, vector<1x8x128xf32>,
    %38 = arith.truncf %26 : vector<32x128xf32> to vector<32x128xbf16>
    %c0_31 = arith.constant 0 : index
    %c0_32 = arith.constant 0 : index
    %39 = vector.load %arg11[%c0_31, %c0_32] : memref<32x128xbf16, #tpu.memory_space<vmem>>, vector<32x128xbf16>
    tpu.vector_store %arg11[%c0_31, %c0_32], %38 {strides = array<i32>} : memref<32x128xbf16, #tpu.memory_space<vmem>>, vector<32x128xbf16>,
    return
  }
  func.func @transform_0(%arg0: i32) -> (i32, i32) {
    %c0_i32 = arith.constant 0 : i32
    %c0_i32_0 = arith.constant 0 : i32
    return %arg0, %c0_i32 : i32, i32
  }
  func.func @transform_1(%arg0: i32) -> (i32, i32) {
    %c0_i32 = arith.constant 0 : i32
    %c0_i32_0 = arith.constant 0 : i32
    return %arg0, %c0_i32 : i32, i32
  }
  func.func @transform_2(%arg0: i32) -> (i32, i32) {
    %c0_i32 = arith.constant 0 : i32
    %c0_i32_0 = arith.constant 0 : i32
    %c0_i32_1 = arith.constant 0 : i32
    return %c0_i32, %c0_i32_0 : i32, i32
  }
  func.func @transform_3(%arg0: i32) -> (i32, i32) {
    %c0_i32 = arith.constant 0 : i32
    %c0_i32_0 = arith.constant 0 : i32
    %c0_i32_1 = arith.constant 0 : i32
    return %c0_i32, %c0_i32_0 : i32, i32
  }
  func.func @transform_4(%arg0: i32) -> (i32, i32) {
    %c0_i32 = arith.constant 0 : i32
    %c0_i32_0 = arith.constant 0 : i32
    %c0_i32_1 = arith.constant 0 : i32
    return %c0_i32, %c0_i32_0 : i32, i32
  }
  func.func @transform_5(%arg0: i32) -> (i32, i32) {
    %c0_i32 = arith.constant 0 : i32
    %c0_i32_0 = arith.constant 0 : i32
    %c0_i32_1 = arith.constant 0 : i32
    return %c0_i32, %c0_i32_0 : i32, i32
  }
  func.func @transform_6(%arg0: i32) -> (i32, i32) {
    %c0_i32 = arith.constant 0 : i32
    %c0_i32_0 = arith.constant 0 : i32
    %c0_i32_1 = arith.constant 0 : i32
    return %c0_i32, %c0_i32_0 : i32, i32
  }
  func.func @transform_7(%arg0: i32) -> (i32, i32) {
    %c0_i32 = arith.constant 0 : i32
    %c0_i32_0 = arith.constant 0 : i32
    %c0_i32_1 = arith.constant 0 : i32
    return %c0_i32, %c0_i32_0 : i32, i32
  }
  func.func @transform_8(%arg0: i32) -> (i32, i32) {
    %c0_i32 = arith.constant 0 : i32
    %c0_i32_0 = arith.constant 0 : i32
    %c0_i32_1 = arith.constant 0 : i32
    return %c0_i32, %c0_i32_0 : i32, i32
  }
  func.func @transform_9(%arg0: i32) -> (i32, i32) {
    %c0_i32 = arith.constant 0 : i32
    %c0_i32_0 = arith.constant 0 : i32
    %c0_i32_1 = arith.constant 0 : i32
    return %c0_i32, %c0_i32_0 : i32, i32
  }
  func.func @transform_10(%arg0: i32) -> (i32, i32) {
    %c0_i32 = arith.constant 0 : i32
    %c0_i32_0 = arith.constant 0 : i32
    return %arg0, %c0_i32 : i32, i32
  }
  func.func @transform_11(%arg0: i32) -> (i32, i32, i32) {
    %c0_i32 = arith.constant 0 : i32
    %c0_i32_0 = arith.constant 0 : i32
    %c0_i32_1 = arith.constant 0 : i32
    return %arg0, %c0_i32, %c0_i32_0 : i32, i32, i32
  }
  func.func @transform_12(%arg0: i32) -> (i32, i32, i32) {
    %c0_i32 = arith.constant 0 : i32
    %c0_i32_0 = arith.constant 0 : i32
    %c0_i32_1 = arith.constant 0 : i32
    return %arg0, %c0_i32, %c0_i32_0 : i32, i32, i32
  }
}

</mosaic_0001>

<llo_original>
// kernel: ialnet_forward.1
$region0: #{ialnet_forward.1}
  #allocation0 [shape = 'u32[]', space=smem, size = 0x4, offset = 0x4, fixed_abs, tag = 'smem constant byte address 0x4 - core index']
  #allocation1 [shape = 'u32[144,128]{1,0:T(1,128)}', space=vmem, size = 0x12000, scoped, tag = 'internal scratch']
  %s0 = inlined_call_operand.vmem [shape: f32[64,16], index: 0, kind: input, shape index: {}]
  %s1 = inlined_call_operand.vmem [shape: f32[64,16], index: 1, kind: input, shape index: {}]
  %s2 = inlined_call_operand.vmem [shape: bf16[16,32], index: 2, kind: input, shape index: {}]
  %s3 = inlined_call_operand.vmem [shape: bf16[16,32], index: 3, kind: input, shape index: {}]
  %s4 = inlined_call_operand.vmem [shape: f32[1,32], index: 4, kind: input, shape index: {}]
  %s5 = inlined_call_operand.vmem [shape: bf16[32,128], index: 5, kind: input, shape index: {}]
  %s6 = inlined_call_operand.vmem [shape: bf16[16,128], index: 6, kind: input, shape index: {}]
  %s7 = inlined_call_operand.vmem [shape: f32[1,128], index: 7, kind: input, shape index: {}]
  %s8 = inlined_call_operand.vmem [shape: bf16[128,128], index: 8, kind: input, shape index: {}]
  %s9 = inlined_call_operand.vmem [shape: f32[1,128], index: 9, kind: input, shape index: {}]
  %s10 = inlined_call_operand.vmem [shape: bf16[64,128], index: 10, kind: output, shape index: {0}]
  %s11 = inlined_call_operand.vmem [shape: f32[2,8,128], index: 11, kind: output, shape index: {1}]
  %s12 = inlined_call_operand.vmem [shape: f32[2,8,128], index: 12, kind: output, shape index: {2}]
  %13 = xla_tuple %s10, %s11, %s12
  %s14 = sld [smem:[#allocation0]]
  $region89: #{ialnet_forward.1} parent=0
    _
  %s16 = ssub.s32 1, %s14
  %s17 = scalar_select 0, %s16, %s14
  loop: start=0, step=1, limit=4
  $region2: #{ialnet_forward.1} parent=0 // loop_pre_header
    _
  $region3: #{ialnet_forward.1} parent=0 // loop_header
    %s19 = sphi 0, %s23
    %p20 = scmp.ge.s32.totalorder %s19, 4
    %s29 = sphi 0, %s31
    %s32 = sphi 0, %s29
    %s33 = sphi 0, %s32
    %s49 = sphi 0, %s33
    %s55 = sphi 0, %s57
    %s58 = sphi 0, %s55
    %s59 = sphi 0, %s58
    %s75 = sphi 0, %s59
    %s79 = sphi 0, %s79
    %s81 = sphi 0, %s79
    %s82 = sphi 0, %s81
    %s96 = sphi 0, %s82
    %s100 = sphi 0, %s100
    %s102 = sphi 0, %s100
    %s103 = sphi 0, %s102
    %s117 = sphi 0, %s103
    %s121 = sphi 0, %s121
    %s123 = sphi 0, %s121
    %s124 = sphi 0, %s123
    %s138 = sphi 0, %s124
    %s142 = sphi 0, %s142
    %s144 = sphi 0, %s142
    %s145 = sphi 0, %s144
    %s159 = sphi 0, %s145
    %s163 = sphi 0, %s163
    %s165 = sphi 0, %s163
    %s166 = sphi 0, %s165
    %s180 = sphi 0, %s166
    %s184 = sphi 0, %s184
    %s186 = sphi 0, %s184
    %s187 = sphi 0, %s186
    %s201 = sphi 0, %s187
    %s205 = sphi 0, %s205
    %s207 = sphi 0, %s205
    %s208 = sphi 0, %s207
    %s222 = sphi 0, %s208
    %s226 = sphi 0, %s226
    %s228 = sphi 0, %s226
    %s229 = sphi 0, %s228
    %s243 = sphi 0, %s229
    %s249 = sphi 0, %s251
    %s252 = sphi 0, %s249
    %s253 = sphi 0, %s252
    %s269 = sphi 0, %s253
    %s275 = sphi 0, %s277
    %s278 = sphi 0, %s275
    %s279 = sphi 0, %s278
    %s295 = sphi 0, %s279
    %s301 = sphi 0, %s303
    %s304 = sphi 0, %s301
    %s305 = sphi 0, %s304
    %s321 = sphi 0, %s305
  $region4: #{ialnet_forward.1} parent=0 // loop_header_branch
    %22 = sbr.rel (%p20) target = $region8
  $region5: #{ialnet_forward.1} parent=0 // loop_body
    %s24 = ssub.s32 %s19, 1
    %s25 = ssub.s32 %s19, 2
    %s26 = sadd.s32 %s19, 1
    %s27 = ssub.s32 %s19, %s26
    %p28 = scmp.eq.s32.totalorder %s27, 0
    %s30 = sadd.s32 %s29, 1
    %s31 = scalar_select %p28, %s29, %s30
    %p34 = pneg %p28
    %p35 = scmp.eq.s32.totalorder %s19, 1
    %p36 = por %p34, %p35
    %p37 = scmp.ne.s32.totalorder %s29, %s32
    %p38 = scmp.eq.s32.totalorder %s19, 0
    %p39 = por %p37, %p38
    %p40 = scmp.ne.s32.totalorder %s29, %s32
    %p41 = scmp.eq.s32.totalorder %s24, 1
    %p42 = por %p40, %p41
    %p43 = scmp.ne.s32.totalorder %s32, %s33
    %p44 = scmp.eq.s32.totalorder %s24, 0
    %p45 = por %p43, %p44
    %p46 = scmp.ne.s32.totalorder %s32, %s33
    %p47 = scmp.eq.s32.totalorder %s25, 1
    %p48 = por %p46, %p47
    %p50 = scmp.ne.s32.totalorder %s33, %s49
    %p51 = scmp.eq.s32.totalorder %s25, 0
    %p52 = por %p50, %p51
    %s53 = ssub.s32 %s19, %s26
    %p54 = scmp.eq.s32.totalorder %s53, 0
    %s56 = sadd.s32 %s55, 1
    %s57 = scalar_select %p54, %s55, %s56
    %p60 = pneg %p54
    %p61 = scmp.eq.s32.totalorder %s19, 1
    %p62 = por %p60, %p61
    %p63 = scmp.ne.s32.totalorder %s55, %s58
    %p64 = scmp.eq.s32.totalorder %s19, 0
    %p65 = por %p63, %p64
    %p66 = scmp.ne.s32.totalorder %s55, %s58
    %p67 = scmp.eq.s32.totalorder %s24, 1
    %p68 = por %p66, %p67
    %p69 = scmp.ne.s32.totalorder %s58, %s59
    %p70 = scmp.eq.s32.totalorder %s24, 0
    %p71 = por %p69, %p70
    %p72 = scmp.ne.s32.totalorder %s58, %s59
    %p73 = scmp.eq.s32.totalorder %s25, 1
    %p74 = por %p72, %p73
    %p76 = scmp.ne.s32.totalorder %s59, %s75
    %p77 = scmp.eq.s32.totalorder %s25, 0
    %p78 = por %p76, %p77
    %s80 = sadd.s32 %s79, 1
    %p83 = scmp.eq.s32.totalorder %s19, 1
    %p84 = scmp.ne.s32.totalorder %s79, %s81
    %p85 = scmp.eq.s32.totalorder %s19, 0
    %p86 = por %p84, %p85
    %p87 = scmp.ne.s32.totalorder %s79, %s81
    %p88 = scmp.eq.s32.totalorder %s24, 1
    %p89 = por %p87, %p88
    %p90 = scmp.ne.s32.totalorder %s81, %s82
    %p91 = scmp.eq.s32.totalorder %s24, 0
    %p92 = por %p90, %p91
    %p93 = scmp.ne.s32.totalorder %s81, %s82
    %p94 = scmp.eq.s32.totalorder %s25, 1
    %p95 = por %p93, %p94
    %p97 = scmp.ne.s32.totalorder %s82, %s96
    %p98 = scmp.eq.s32.totalorder %s25, 0
    %p99 = por %p97, %p98
    %s101 = sadd.s32 %s100, 1
    %p104 = scmp.eq.s32.totalorder %s19, 1
    %p105 = scmp.ne.s32.totalorder %s100, %s102
    %p106 = scmp.eq.s32.totalorder %s19, 0
    %p107 = por %p105, %p106
    %p108 = scmp.ne.s32.totalorder %s100, %s102
    %p109 = scmp.eq.s32.totalorder %s24, 1
    %p110 = por %p108, %p109
    %p111 = scmp.ne.s32.totalorder %s102, %s103
    %p112 = scmp.eq.s32.totalorder %s24, 0
    %p113 = por %p111, %p112
    %p114 = scmp.ne.s32.totalorder %s102, %s103
    %p115 = scmp.eq.s32.totalorder %s25, 1
    %p116 = por %p114, %p115
    %p118 = scmp.ne.s32.totalorder %s103, %s117
    %p119 = scmp.eq.s32.totalorder %s25, 0
    %p120 = por %p118, %p119
    %s122 = sadd.s32 %s121, 1
    %p125 = scmp.eq.s32.totalorder %s19, 1
    %p126 = scmp.ne.s32.totalorder %s121, %s123
    %p127 = scmp.eq.s32.totalorder %s19, 0
    %p128 = por %p126, %p127
    %p129 = scmp.ne.s32.totalorder %s121, %s123
    %p130 = scmp.eq.s32.totalorder %s24, 1
    %p131 = por %p129, %p130
    %p132 = scmp.ne.s32.totalorder %s123, %s124
    %p133 = scmp.eq.s32.totalorder %s24, 0
    %p134 = por %p132, %p133
    %p135 = scmp.ne.s32.totalorder %s123, %s124
    %p136 = scmp.eq.s32.totalorder %s25, 1
    %p137 = por %p135, %p136
    %p139 = scmp.ne.s32.totalorder %s124, %s138
    %p140 = scmp.eq.s32.totalorder %s25, 0
    %p141 = por %p139, %p140
    %s143 = sadd.s32 %s142, 1
    %p146 = scmp.eq.s32.totalorder %s19, 1
    %p147 = scmp.ne.s32.totalorder %s142, %s144
    %p148 = scmp.eq.s32.totalorder %s19, 0
    %p149 = por %p147, %p148
    %p150 = scmp.ne.s32.totalorder %s142, %s144
    %p151 = scmp.eq.s32.totalorder %s24, 1
    %p152 = por %p150, %p151
    %p153 = scmp.ne.s32.totalorder %s144, %s145
    %p154 = scmp.eq.s32.totalorder %s24, 0
    %p155 = por %p153, %p154
    %p156 = scmp.ne.s32.totalorder %s144, %s145
    %p157 = scmp.eq.s32.totalorder %s25, 1
    %p158 = por %p156, %p157
    %p160 = scmp.ne.s32.totalorder %s145, %s159
    %p161 = scmp.eq.s32.totalorder %s25, 0
    %p162 = por %p160, %p161
    %s164 = sadd.s32 %s163, 1
    %p167 = scmp.eq.s32.totalorder %s19, 1
    %p168 = scmp.ne.s32.totalorder %s163, %s165
    %p169 = scmp.eq.s32.totalorder %s19, 0
    %p170 = por %p168, %p169
    %p171 = scmp.ne.s32.totalorder %s163, %s165
    %p172 = scmp.eq.s32.totalorder %s24, 1
    %p173 = por %p171, %p172
    %p174 = scmp.ne.s32.totalorder %s165, %s166
    %p175 = scmp.eq.s32.totalorder %s24, 0
    %p176 = por %p174, %p175
    %p177 = scmp.ne.s32.totalorder %s165, %s166
    %p178 = scmp.eq.s32.totalorder %s25, 1
    %p179 = por %p177, %p178
    %p181 = scmp.ne.s32.totalorder %s166, %s180
    %p182 = scmp.eq.s32.totalorder %s25, 0
    %p183 = por %p181, %p182
    %s185 = sadd.s32 %s184, 1
    %p188 = scmp.eq.s32.totalorder %s19, 1
    %p189 = scmp.ne.s32.totalorder %s184, %s186
    %p190 = scmp.eq.s32.totalorder %s19, 0
    %p191 = por %p189, %p190
    %p192 = scmp.ne.s32.totalorder %s184, %s186
    %p193 = scmp.eq.s32.totalorder %s24, 1
    %p194 = por %p192, %p193
    %p195 = scmp.ne.s32.totalorder %s186, %s187
    %p196 = scmp.eq.s32.totalorder %s24, 0
    %p197 = por %p195, %p196
    %p198 = scmp.ne.s32.totalorder %s186, %s187
    %p199 = scmp.eq.s32.totalorder %s25, 1
    %p200 = por %p198, %p199
    %p202 = scmp.ne.s32.totalorder %s187, %s201
    %p203 = scmp.eq.s32.totalorder %s25, 0
    %p204 = por %p202, %p203
    %s206 = sadd.s32 %s205, 1
    %p209 = scmp.eq.s32.totalorder %s19, 1
    %p210 = scmp.ne.s32.totalorder %s205, %s207
    %p211 = scmp.eq.s32.totalorder %s19, 0
    %p212 = por %p210, %p211
    %p213 = scmp.ne.s32.totalorder %s205, %s207
    %p214 = scmp.eq.s32.totalorder %s24, 1
    %p215 = por %p213, %p214
    %p216 = scmp.ne.s32.totalorder %s207, %s208
    %p217 = scmp.eq.s32.totalorder %s24, 0
    %p218 = por %p216, %p217
    %p219 = scmp.ne.s32.totalorder %s207, %s208
    %p220 = scmp.eq.s32.totalorder %s25, 1
    %p221 = por %p219, %p220
    %p223 = scmp.ne.s32.totalorder %s208, %s222
    %p224 = scmp.eq.s32.totalorder %s25, 0
    %p225 = por %p223, %p224
    %s227 = sadd.s32 %s226, 1
    %p230 = scmp.eq.s32.totalorder %s19, 1
    %p231 = scmp.ne.s32.totalorder %s226, %s228
    %p232 = scmp.eq.s32.totalorder %s19, 0
    %p233 = por %p231, %p232
    %p234 = scmp.ne.s32.totalorder %s226, %s228
    %p235 = scmp.eq.s32.totalorder %s24, 1
    %p236 = por %p234, %p235
    %p237 = scmp.ne.s32.totalorder %s228, %s229
    %p238 = scmp.eq.s32.totalorder %s24, 0
    %p239 = por %p237, %p238
    %p240 = scmp.ne.s32.totalorder %s228, %s229
    %p241 = scmp.eq.s32.totalorder %s25, 1
    %p242 = por %p240, %p241
    %p244 = scmp.ne.s32.totalorder %s229, %s243
    %p245 = scmp.eq.s32.totalorder %s25, 0
    %p246 = por %p244, %p245
    %s247 = ssub.s32 %s19, %s26
    %p248 = scmp.eq.s32.totalorder %s247, 0
    %s250 = sadd.s32 %s249, 1
    %s251 = scalar_select %p248, %s249, %s250
    %p254 = pneg %p248
    %p255 = scmp.eq.s32.totalorder %s19, 1
    %p256 = por %p254, %p255
    %p257 = scmp.ne.s32.totalorder %s249, %s252
    %p258 = scmp.eq.s32.totalorder %s19, 0
    %p259 = por %p257, %p258
    %p260 = scmp.ne.s32.totalorder %s249, %s252
    %p261 = scmp.eq.s32.totalorder %s24, 1
    %p262 = por %p260, %p261
    %p263 = scmp.ne.s32.totalorder %s252, %s253
    %p264 = scmp.eq.s32.totalorder %s24, 0
    %p265 = por %p263, %p264
    %p266 = scmp.ne.s32.totalorder %s252, %s253
    %p267 = scmp.eq.s32.totalorder %s25, 1
    %p268 = por %p266, %p267
    %p270 = scmp.ne.s32.totalorder %s253, %s269
    %p271 = scmp.eq.s32.totalorder %s25, 0
    %p272 = por %p270, %p271
    %s273 = ssub.s32 %s19, %s26
    %p274 = scmp.eq.s32.totalorder %s273, 0
    %s276 = sadd.s32 %s275, 1
    %s277 = scalar_select %p274, %s275, %s276
    %p280 = pneg %p274
    %p281 = scmp.eq.s32.totalorder %s19, 1
    %p282 = por %p280, %p281
    %p283 = scmp.ne.s32.totalorder %s275, %s278
    %p284 = scmp.eq.s32.totalorder %s19, 0
    %p285 = por %p283, %p284
    %p286 = scmp.ne.s32.totalorder %s275, %s278
    %p287 = scmp.eq.s32.totalorder %s24, 1
    %p288 = por %p286, %p287
    %p289 = scmp.ne.s32.totalorder %s278, %s279
    %p290 = scmp.eq.s32.totalorder %s24, 0
    %p291 = por %p289, %p290
    %p292 = scmp.ne.s32.totalorder %s278, %s279
    %p293 = scmp.eq.s32.totalorder %s25, 1
    %p294 = por %p292, %p293
    %p296 = scmp.ne.s32.totalorder %s279, %s295
    %p297 = scmp.eq.s32.totalorder %s25, 0
    %p298 = por %p296, %p297
    %s299 = ssub.s32 %s19, %s26
    %p300 = scmp.eq.s32.totalorder %s299, 0
    %s302 = sadd.s32 %s301, 1
    %s303 = scalar_select %p300, %s301, %s302
    %p306 = pneg %p300
    %p307 = scmp.eq.s32.totalorder %s19, 1
    %p308 = por %p306, %p307
    %p309 = scmp.ne.s32.totalorder %s301, %s304
    %p310 = scmp.eq.s32.totalorder %s19, 0
    %p311 = por %p309, %p310
    %p312 = scmp.ne.s32.totalorder %s301, %s304
    %p313 = scmp.eq.s32.totalorder %s24, 1
    %p314 = por %p312, %p313
    %p315 = scmp.ne.s32.totalorder %s304, %s305
    %p316 = scmp.eq.s32.totalorder %s24, 0
    %p317 = por %p315, %p316
    %p318 = scmp.ne.s32.totalorder %s304, %s305
    %p319 = scmp.eq.s32.totalorder %s25, 1
    %p320 = por %p318, %p319
    %p322 = scmp.ne.s32.totalorder %s305, %s321
    %p323 = scmp.eq.s32.totalorder %s25, 0
    %p324 = por %p322, %p323
    %p325 = scmp.le.s32.totalorder 1, %s19
    %p326 = scmp.lt.s32.totalorder %s19, 3
    %p327 = pnand %p325, %p326
    %p328 = pneg %p327
    // Predicated region
    $region9: #{ialnet_forward.1} parent=5 // pred_check
      _
    $region10: #{ialnet_forward.1} parent=5 // pred_check_branch
      %330 = sbr.rel (%p327) target = $region12
    $region11: #{ialnet_forward.1} parent=5 // pred_region
      %s331 = ssub.s32 %s19, 1
      // Predicated region
      $region13: #{ialnet_forward.1} parent=11 // pred_check
        %p332 = pneg %p92
      $region14: #{ialnet_forward.1} parent=11 // pred_check_branch
        %334 = sbr.rel (%p332) target = $region16
      $region15: #{ialnet_forward.1} parent=11 // pred_region
        _
      $region16: #{ialnet_forward.1} parent=11 // pred_fallthru
        _
      // Predicated region
      $region17: #{ialnet_forward.1} parent=11 // pred_check
        %p335 = pneg %p113
      $region18: #{ialnet_forward.1} parent=11 // pred_check_branch
        %337 = sbr.rel (%p335) target = $region20
      $region19: #{ialnet_forward.1} parent=11 // pred_region
        _
      $region20: #{ialnet_forward.1} parent=11 // pred_fallthru
        _
      // Predicated region
      $region21: #{ialnet_forward.1} parent=11 // pred_check
        %p338 = pneg %p134
      $region22: #{ialnet_forward.1} parent=11 // pred_check_branch
        %340 = sbr.rel (%p338) target = $region24
      $region23: #{ialnet_forward.1} parent=11 // pred_region
        _
      $region24: #{ialnet_forward.1} parent=11 // pred_fallthru
        _
      // Predicated region
      $region25: #{ialnet_forward.1} parent=11 // pred_check
        %p341 = pneg %p155
      $region26: #{ialnet_forward.1} parent=11 // pred_check_branch
        %343 = sbr.rel (%p341) target = $region28
      $region27: #{ialnet_forward.1} parent=11 // pred_region
        _
      $region28: #{ialnet_forward.1} parent=11 // pred_fallthru
        _
      // Predicated region
      $region29: #{ialnet_forward.1} parent=11 // pred_check
        %p344 = pneg %p176
      $region30: #{ialnet_forward.1} parent=11 // pred_check_branch
        %346 = sbr.rel (%p344) target = $region32
      $region31: #{ialnet_forward.1} parent=11 // pred_region
        _
      $region32: #{ialnet_forward.1} parent=11 // pred_fallthru
        _
      // Predicated region
      $region33: #{ialnet_forward.1} parent=11 // pred_check
        %p347 = pneg %p197
      $region34: #{ialnet_forward.1} parent=11 // pred_check_branch
        %349 = sbr.rel (%p347) target = $region36
      $region35: #{ialnet_forward.1} parent=11 // pred_region
        _
      $region36: #{ialnet_forward.1} parent=11 // pred_fallthru
        _
      // Predicated region
      $region37: #{ialnet_forward.1} parent=11 // pred_check
        %p350 = pneg %p218
      $region38: #{ialnet_forward.1} parent=11 // pred_check_branch
        %352 = sbr.rel (%p350) target = $region40
      $region39: #{ialnet_forward.1} parent=11 // pred_region
        _
      $region40: #{ialnet_forward.1} parent=11 // pred_fallthru
        _
      // Predicated region
      $region41: #{ialnet_forward.1} parent=11 // pred_check
        %p353 = pneg %p239
      $region42: #{ialnet_forward.1} parent=11 // pred_check_branch
        %355 = sbr.rel (%p353) target = $region44
      $region43: #{ialnet_forward.1} parent=11 // pred_region
        _
      $region44: #{ialnet_forward.1} parent=11 // pred_fallthru
        _
    $region12: #{ialnet_forward.1} parent=5 // pred_fallthru
      _
    %p356 = scmp.lt.s32.totalorder %s19, 2
    // Predicated region
    $region45: #{ialnet_forward.1} parent=5 // pred_check
      %p357 = pneg %p356
    $region46: #{ialnet_forward.1} parent=5 // pred_check_branch
      %359 = sbr.rel (%p357) target = $region48
    $region47: #{ialnet_forward.1} parent=5 // pred_region
      // Predicated region
      $region49: #{ialnet_forward.1} parent=47 // pred_check
        %p360 = pneg %p39
      $region50: #{ialnet_forward.1} parent=47 // pred_check_branch
        %362 = sbr.rel (%p360) target = $region52
      $region51: #{ialnet_forward.1} parent=47 // pred_region
        %s363 = smul.u32 4, %s19
        %p364 = scmp.lt.s32.totalorder %s363, 7
        %s365 = scalar_select %p364, %s363, 7
        %s366 = smul.addr %s365, 8
        %s367 = scalar_lea.vmem %s0, %s366
        %s368 = smul.u32 4, %s19
      $region52: #{ialnet_forward.1} parent=47 // pred_fallthru
        _
      // Predicated region
      $region53: #{ialnet_forward.1} parent=47 // pred_check
        %p369 = pneg %p65
      $region54: #{ialnet_forward.1} parent=47 // pred_check_branch
        %371 = sbr.rel (%p369) target = $region56
      $region55: #{ialnet_forward.1} parent=47 // pred_region
        %s372 = smul.u32 4, %s19
        %p373 = scmp.lt.s32.totalorder %s372, 7
        %s374 = scalar_select %p373, %s372, 7
        %s375 = smul.addr %s374, 8
        %s376 = scalar_lea.vmem %s1, %s375
        %s377 = smul.u32 4, %s19
      $region56: #{ialnet_forward.1} parent=47 // pred_fallthru
        _
    $region48: #{ialnet_forward.1} parent=5 // pred_fallthru
      _
    %p378 = scmp.le.s32.totalorder 1, %s19
    %p379 = scmp.lt.s32.totalorder %s19, 3
    %p380 = pnand %p378, %p379
    %p381 = pneg %p380
    // Predicated region
    $region57: #{ialnet_forward.1} parent=5 // pred_check
      _
    $region58: #{ialnet_forward.1} parent=5 // pred_check_branch
      %383 = sbr.rel (%p380) target = $region60
    $region59: #{ialnet_forward.1} parent=5 // pred_region
      %s384 = ssub.s32 %s19, 1
      %s385 = smul.u32 4, %s24
      %p386 = scmp.lt.s32.totalorder %s385, 7
      %s387 = scalar_select %p386, %s385, 7
      %s388 = smul.addr %s387, 8
      %s389 = scalar_lea.vmem %s0, %s388
      %p390 = pneg %p45
      %p391 = pneg %p42
      %s392 = smul.u32 4, %s24
      %p393 = scmp.lt.s32.totalorder %s392, 7
      %s394 = scalar_select %p393, %s392, 7
      %s395 = smul.addr %s394, 8
      %s396 = scalar_lea.vmem %s1, %s395
      %p397 = pneg %p71
      %p398 = pneg %p68
      %p399 = pneg %p92
      %p400 = pneg %p89
      %p401 = pneg %p113
      %p402 = pneg %p110
      %p403 = pneg %p134
      %p404 = pneg %p131
      %p405 = pneg %p155
      %p406 = pneg %p152
      %p407 = pneg %p176
      %p408 = pneg %p173
      %p409 = pneg %p197
      %p410 = pneg %p194
      %p411 = pneg %p218
      %p412 = pneg %p215
      %p413 = pneg %p239
      %p414 = pneg %p236
      %p415 = pneg %p265
      %p416 = pneg %p262
      %s417 = smul.u32 4, %s24
      %p418 = scmp.lt.s32.totalorder %s417, 7
      %s419 = scalar_select %p418, %s417, 7
      %s420 = smul.addr %s419, 4
      %s421 = scalar_lea.vmem %s10, %s420
      %p422 = pneg %p291
      %p423 = pneg %p288
      %p424 = scmp.lt.s32.totalorder %s24, 1
      %s425 = scalar_select %p424, %s24, 1
      %s426 = smul.addr %s425, 8
      %s427 = scalar_lea.vmem %s11, %s426
      %p428 = pneg %p317
      %p429 = pneg %p314
      %p430 = scmp.lt.s32.totalorder %s24, 1
      %s431 = scalar_select %p430, %s24, 1
      %s432 = smul.addr %s431, 8
      %s433 = scalar_lea.vmem %s12, %s432
      %s434 = smul.u32 4, %s24
      %p435 = scmp.lt.s32.totalorder %s434, 7
      %s436 = scalar_select %p435, %s434, 7
      %s437 = smul.addr %s436, 8
      %s438 = scalar_lea.vmem %s0, %s437
      %s439 = smul.u32 4, %s24
      %s440 = smul.u32 4, %s24
      %p441 = scmp.lt.s32.totalorder %s440, 7
      %s442 = scalar_select %p441, %s440, 7
      %s443 = smul.addr %s442, 8
      %s444 = scalar_lea.vmem %s1, %s443
      %s445 = smul.u32 4, %s24
      %s446 = smul.u32 4, %s24
      %p447 = scmp.lt.s32.totalorder %s446, 7
      %s448 = scalar_select %p447, %s446, 7
      %s449 = smul.addr %s448, 4
      %s450 = scalar_lea.vmem %s10, %s449
      %s451 = smul.u32 4, %s24
      %p452 = scmp.lt.s32.totalorder %s24, 1
      %s453 = scalar_select %p452, %s24, 1
      %s454 = smul.addr %s453, 8
      %s455 = scalar_lea.vmem %s11, %s454
      %p456 = scmp.lt.s32.totalorder %s24, 1
      %s457 = scalar_select %p456, %s24, 1
      %s458 = smul.addr %s457, 8
      %s459 = scalar_lea.vmem %s12, %s458
      %v461 = vld [vmem:[%s438] sm:$0xff]
      %v462 = vld [vmem:[%s438 + $0x8] sm:$0xff]
      %v463 = vld [vmem:[%s438 + $0x10] sm:$0xff]
      %v464 = vld [vmem:[%s438 + $0x18] sm:$0xff]
      %v465 = vpack.c.bf16 %v462, %v461
      %v466 = vpack.c.bf16 %v464, %v463
      %v467 = vld [vmem:[%s444] sm:$0xff]
      %v468 = vld [vmem:[%s444 + $0x8] sm:$0xff]
      %v469 = vld [vmem:[%s444 + $0x10] sm:$0xff]
      %v470 = vld [vmem:[%s444 + $0x18] sm:$0xff]
      %v471 = vpack.c.bf16 %v468, %v467
      %v472 = vpack.c.bf16 %v470, %v469
      %v473 = vld [vmem:[%s2] sm:$0xf]
      %v474 = vld [vmem:[%s2 + $0x4] sm:$0xf]
      %v475 = vld [vmem:[%s3] sm:$0xf]
      %v476 = vld [vmem:[%s3 + $0x4] sm:$0xf]
      %v479 = vunpack.c.l.b16 %v475
      %v480 = vunpack.c.l.b16 %v476
      %v481 = vpack.c.b16 %v480, %v479
      %vm483 = vcmask 130048
      %v485 = vsel %vm483, %v471, 0
      %v488 = vsel %vm483, %v472, 0
      %490 = vmatprep.subr.bf16.mxu0 0
      %491 = vmatpush1.bf16.msra.mxu0 %v481
      %492 = vmatprep.subr.bf16.mxu0 0
      %493 = vmatpush1.bf16.msra.mxu0 0
      %494 = vmatprep.subr.bf16.mxu0 0
      %495 = vmatpush1.bf16.msra.mxu0 0
      %496 = vmatprep.subr.bf16.mxu0 0
      %497 = vmatpush1.bf16.msra.mxu0 0
      %498 = vmatprep.subr.bf16.mxu0 0
      %499 = vmatpush1.bf16.msra.mxu0 0
      %500 = vmatprep.subr.bf16.mxu0 0
      %501 = vmatpush1.bf16.msra.mxu0 0
      %502 = vmatprep.subr.bf16.mxu0 0
      %503 = vmatpush1.bf16.msra.mxu0 0
      %504 = vmatprep.subr.bf16.mxu0 0
      %505 = vmatpush1.bf16.msra.mxu0 0
      %506 = vmatprep.subr.bf16.mxu0 0
      %507 = vmatpush1.bf16.msra.mxu0 0
      %508 = vmatprep.subr.bf16.mxu0 0
      %509 = vmatpush1.bf16.msra.mxu0 0
      %510 = vmatprep.subr.bf16.mxu0 0
      %511 = vmatpush1.bf16.msra.mxu0 0
      %512 = vmatprep.subr.bf16.mxu0 0
      %513 = vmatpush1.bf16.msra.mxu0 0
      %514 = vmatprep.subr.bf16.mxu0 0
      %515 = vmatpush1.bf16.msra.mxu0 0
      %516 = vmatprep.subr.bf16.mxu0 0
      %517 = vmatpush1.bf16.msra.mxu0 0
      %518 = vmatprep.subr.bf16.mxu0 0
      %519 = vmatpush1.bf16.msra.mxu0 0
      %520 = vmatprep.subr.bf16.mxu0 0
      %521 = vmatpush1.bf16.msra.mxu0 0
      %522 = vmatprep.mubr.bf16.mxu0 0
      %523 = vmatmul.mubr.bf16.gmra.mrb[0].mxu0 %v485
      %v524 = vpop.f32.mrb[0].mxu0
      %v525 = vadd.f32 0.0, %v524
      %v526 = vpop.f32.mrb[0].mxu0
      %v527 = vpop.f32.mrb[0].mxu0
      %v528 = vadd.f32 0.0, %v527
      %v529 = vpop.f32.mrb[0].mxu0
      %530 = vmatprep.mubr.bf16.mxu0 0
      %531 = vmatmul.mubr.bf16.gmra.mrb[0].mxu0 %v488
      %v532 = vpop.f32.mrb[0].mxu0
      %v533 = vadd.f32 0.0, %v532
      %v534 = vpop.f32.mrb[0].mxu0
      %v535 = vpop.f32.mrb[0].mxu0
      %v536 = vadd.f32 0.0, %v535
      %v537 = vpop.f32.mrb[0].mxu0
      %538 = vdwg.mxu0
      %v541 = vunpack.c.l.b16 %v473
      %v542 = vunpack.c.l.b16 %v474
      %v543 = vpack.c.b16 %v542, %v541
      %v546 = vsel %vm483, %v465, 0
      %v549 = vsel %vm483, %v466, 0
      %551 = vmatprep.subr.bf16.mxu0 0
      %552 = vmatpush1.bf16.msra.mxu0 %v543
      %553 = vmatprep.subr.bf16.mxu0 0
      %554 = vmatpush1.bf16.msra.mxu0 0
      %555 = vmatprep.subr.bf16.mxu0 0
      %556 = vmatpush1.bf16.msra.mxu0 0
      %557 = vmatprep.subr.bf16.mxu0 0
      %558 = vmatpush1.bf16.msra.mxu0 0
      %559 = vmatprep.subr.bf16.mxu0 0
      %560 = vmatpush1.bf16.msra.mxu0 0
      %561 = vmatprep.subr.bf16.mxu0 0
      %562 = vmatpush1.bf16.msra.mxu0 0
      %563 = vmatprep.subr.bf16.mxu0 0
      %564 = vmatpush1.bf16.msra.mxu0 0
      %565 = vmatprep.subr.bf16.mxu0 0
      %566 = vmatpush1.bf16.msra.mxu0 0
      %567 = vmatprep.subr.bf16.mxu0 0
      %568 = vmatpush1.bf16.msra.mxu0 0
      %569 = vmatprep.subr.bf16.mxu0 0
      %570 = vmatpush1.bf16.msra.mxu0 0
      %571 = vmatprep.subr.bf16.mxu0 0
      %572 = vmatpush1.bf16.msra.mxu0 0
      %573 = vmatprep.subr.bf16.mxu0 0
      %574 = vmatpush1.bf16.msra.mxu0 0
      %575 = vmatprep.subr.bf16.mxu0 0
      %576 = vmatpush1.bf16.msra.mxu0 0
      %577 = vmatprep.subr.bf16.mxu0 0
      %578 = vmatpush1.bf16.msra.mxu0 0
      %579 = vmatprep.subr.bf16.mxu0 0
      %580 = vmatpush1.bf16.msra.mxu0 0
      %581 = vmatprep.subr.bf16.mxu0 0
      %582 = vmatpush1.bf16.msra.mxu0 0
      %583 = vmatprep.mubr.bf16.mxu0 0
      %584 = vmatmul.mubr.bf16.gmra.mrb[0].mxu0 %v546
      %v585 = vpop.f32.mrb[0].mxu0
      %v586 = vadd.f32 %v525, %v585
      %v587 = vpop.f32.mrb[0].mxu0
      %v588 = vpop.f32.mrb[0].mxu0
      %v589 = vadd.f32 %v528, %v588
      %v590 = vpop.f32.mrb[0].mxu0
      %591 = vmatprep.mubr.bf16.mxu0 0
      %592 = vmatmul.mubr.bf16.gmra.mrb[0].mxu0 %v549
      %v593 = vpop.f32.mrb[0].mxu0
      %v594 = vadd.f32 %v533, %v593
      %v595 = vpop.f32.mrb[0].mxu0
      %v596 = vpop.f32.mrb[0].mxu0
      %v597 = vadd.f32 %v536, %v596
      %v598 = vpop.f32.mrb[0].mxu0
      %599 = vdwg.mxu0
      %v600 = vld [vmem:[%s4] sm:$0x1]
      %v602 = vlaneseq
      %v603 = vshrl.u32 %v602, 7
      %v604 = vsub.s32 0, %v603
      %v605 = vrot.slane %v600, %v604
      %v607 = vadd.f32 %v586, %v605
      %v608 = vadd.f32 %v589, %v605
      %v609 = vadd.f32 %v594, %v605
      %v610 = vadd.f32 %v597, %v605
      %v611 = vpack.c.bf16 %v608, %v607
      %v612 = vpack.c.bf16 %v610, %v609
      %v613 = vld [vmem:[%s5] sm:$0xf]
      %v614 = vld [vmem:[%s5 + $0x4] sm:$0xf]
      %v615 = vld [vmem:[%s5 + $0x8] sm:$0xf]
      %v616 = vld [vmem:[%s5 + $0xc] sm:$0xf]
      %v617 = vld [vmem:[%s6] sm:$0xf]
      %v618 = vld [vmem:[%s6 + $0x4] sm:$0xf]
      %v621 = vunpack.c.l.b16 %v617
      %v622 = vunpack.c.l.b16 %v618
      %v623 = vpack.c.b16 %v622, %v621
      %625 = vmatprep.subr.bf16.mxu0 0
      %626 = vmatpush1.bf16.msra.mxu0 %v623
      %627 = vmatprep.subr.bf16.mxu0 0
      %628 = vmatpush1.bf16.msra.mxu0 0
      %629 = vmatprep.subr.bf16.mxu0 0
      %630 = vmatpush1.bf16.msra.mxu0 0
      %631 = vmatprep.subr.bf16.mxu0 0
      %632 = vmatpush1.bf16.msra.mxu0 0
      %633 = vmatprep.subr.bf16.mxu0 0
      %634 = vmatpush1.bf16.msra.mxu0 0
      %635 = vmatprep.subr.bf16.mxu0 0
      %636 = vmatpush1.bf16.msra.mxu0 0
      %637 = vmatprep.subr.bf16.mxu0 0
      %638 = vmatpush1.bf16.msra.mxu0 0
      %639 = vmatprep.subr.bf16.mxu0 0
      %640 = vmatpush1.bf16.msra.mxu0 0
      %641 = vmatprep.subr.bf16.mxu0 0
      %642 = vmatpush1.bf16.msra.mxu0 0
      %643 = vmatprep.subr.bf16.mxu0 0
      %644 = vmatpush1.bf16.msra.mxu0 0
      %645 = vmatprep.subr.bf16.mxu0 0
      %646 = vmatpush1.bf16.msra.mxu0 0
      %647 = vmatprep.subr.bf16.mxu0 0
      %648 = vmatpush1.bf16.msra.mxu0 0
      %649 = vmatprep.subr.bf16.mxu0 0
      %650 = vmatpush1.bf16.msra.mxu0 0
      %651 = vmatprep.subr.bf16.mxu0 0
      %652 = vmatpush1.bf16.msra.mxu0 0
      %653 = vmatprep.subr.bf16.mxu0 0
      %654 = vmatpush1.bf16.msra.mxu0 0
      %655 = vmatprep.subr.bf16.mxu0 0
      %656 = vmatpush1.bf16.msra.mxu0 0
      %657 = vmatprep.mubr.bf16.mxu0 0
      %658 = vmatmul.mubr.bf16.gmra.mrb[0].mxu0 %v546
      %v659 = vpop.f32.mrb[0].mxu0
      %v660 = vadd.f32 0.0, %v659
      %v661 = vpop.f32.mrb[0].mxu0
      %v662 = vpop.f32.mrb[0].mxu0
      %v663 = vadd.f32 0.0, %v662
      %v664 = vpop.f32.mrb[0].mxu0
      %665 = vmatprep.mubr.bf16.mxu0 0
      %666 = vmatmul.mubr.bf16.gmra.mrb[0].mxu0 %v549
      %v667 = vpop.f32.mrb[0].mxu0
      %v668 = vadd.f32 0.0, %v667
      %v669 = vpop.f32.mrb[0].mxu0
      %v670 = vpop.f32.mrb[0].mxu0
      %v671 = vadd.f32 0.0, %v670
      %v672 = vpop.f32.mrb[0].mxu0
      %673 = vdwg.mxu0
      %v678 = vunpack.c.l.b16 %v613
      %v679 = vunpack.c.l.b16 %v614
      %v680 = vunpack.c.l.b16 %v615
      %v681 = vunpack.c.l.b16 %v616
      %v682 = vpack.c.b16 %v679, %v678
      %v683 = vpack.c.b16 %v681, %v680
      %vm686 = vcmask 261120
      %v688 = vsel %vm686, %v611, 0
      %v691 = vsel %vm686, %v612, 0
      %693 = vmatprep.subr.bf16.mxu0 0
      %694 = vmatpush1.bf16.msra.mxu0 %v682
      %695 = vmatprep.subr.bf16.mxu0 0
      %696 = vmatpush1.bf16.msra.mxu0 %v683
      %697 = vmatprep.subr.bf16.mxu0 0
      %698 = vmatpush1.bf16.msra.mxu0 0
      %699 = vmatprep.subr.bf16.mxu0 0
      %700 = vmatpush1.bf16.msra.mxu0 0
      %701 = vmatprep.subr.bf16.mxu0 0
      %702 = vmatpush1.bf16.msra.mxu0 0
      %703 = vmatprep.subr.bf16.mxu0 0
      %704 = vmatpush1.bf16.msra.mxu0 0
      %705 = vmatprep.subr.bf16.mxu0 0
      %706 = vmatpush1.bf16.msra.mxu0 0
      %707 = vmatprep.subr.bf16.mxu0 0
      %708 = vmatpush1.bf16.msra.mxu0 0
      %709 = vmatprep.subr.bf16.mxu0 0
      %710 = vmatpush1.bf16.msra.mxu0 0
      %711 = vmatprep.subr.bf16.mxu0 0
      %712 = vmatpush1.bf16.msra.mxu0 0
      %713 = vmatprep.subr.bf16.mxu0 0
      %714 = vmatpush1.bf16.msra.mxu0 0
      %715 = vmatprep.subr.bf16.mxu0 0
      %716 = vmatpush1.bf16.msra.mxu0 0
      %717 = vmatprep.subr.bf16.mxu0 0
      %718 = vmatpush1.bf16.msra.mxu0 0
      %719 = vmatprep.subr.bf16.mxu0 0
      %720 = vmatpush1.bf16.msra.mxu0 0
      %721 = vmatprep.subr.bf16.mxu0 0
      %722 = vmatpush1.bf16.msra.mxu0 0
      %723 = vmatprep.subr.bf16.mxu0 0
      %724 = vmatpush1.bf16.msra.mxu0 0
      %725 = vmatprep.mubr.bf16.mxu0 0
      %726 = vmatmul.mubr.bf16.gmra.mrb[0].mxu0 %v688
      %v727 = vpop.f32.mrb[0].mxu0
      %v728 = vadd.f32 %v660, %v727
      %v729 = vpop.f32.mrb[0].mxu0
      %v730 = vpop.f32.mrb[0].mxu0
      %v731 = vadd.f32 %v663, %v730
      %v732 = vpop.f32.mrb[0].mxu0
      %733 = vmatprep.mubr.bf16.mxu0 0
      %734 = vmatmul.mubr.bf16.gmra.mrb[0].mxu0 %v691
      %v735 = vpop.f32.mrb[0].mxu0
      %v736 = vadd.f32 %v668, %v735
      %v737 = vpop.f32.mrb[0].mxu0
      %v738 = vpop.f32.mrb[0].mxu0
      %v739 = vadd.f32 %v671, %v738
      %v740 = vpop.f32.mrb[0].mxu0
      %741 = vdwg.mxu0
      %v742 = vld [vmem:[%s7] sm:$0x1]
      %v744 = vlaneseq
      %v745 = vshrl.u32 %v744, 7
      %v746 = vsub.s32 0, %v745
      %v747 = vrot.slane %v742, %v746
      %v749 = vadd.f32 %v728, %v747
      %v750 = vadd.f32 %v731, %v747
      %v751 = vadd.f32 %v736, %v747
      %v752 = vadd.f32 %v739, %v747
      %v753 = vpack.c.bf16 %v750, %v749
      %v754 = vpack.c.bf16 %v752, %v751
      %v755 = vld [vmem:[%s8] sm:$0xf]
      %v756 = vld [vmem:[%s8 + $0x4] sm:$0xf]
      %v757 = vld [vmem:[%s8 + $0x8] sm:$0xf]
      %v758 = vld [vmem:[%s8 + $0xc] sm:$0xf]
      %v759 = vld [vmem:[%s8 + $0x10] sm:$0xf]
      %v760 = vld [vmem:[%s8 + $0x14] sm:$0xf]
      %v761 = vld [vmem:[%s8 + $0x18] sm:$0xf]
      %v762 = vld [vmem:[%s8 + $0x1c] sm:$0xf]
      %v763 = vld [vmem:[%s8 + $0x20] sm:$0xf]
      %v764 = vld [vmem:[%s8 + $0x24] sm:$0xf]
      %v765 = vld [vmem:[%s8 + $0x28] sm:$0xf]
      %v766 = vld [vmem:[%s8 + $0x2c] sm:$0xf]
      %v767 = vld [vmem:[%s8 + $0x30] sm:$0xf]
      %v768 = vld [vmem:[%s8 + $0x34] sm:$0xf]
      %v769 = vld [vmem:[%s8 + $0x38] sm:$0xf]
      %v770 = vld [vmem:[%s8 + $0x3c] sm:$0xf]
      %v771 = vld [vmem:[%s9] sm:$0x1]
      %v773 = vlaneseq
      %v774 = vshrl.u32 %v773, 7
      %v775 = vsub.s32 0, %v774
      %v776 = vrot.slane %v771, %v775
      %v794 = vunpack.c.l.b16 %v755
      %v795 = vunpack.c.l.b16 %v756
      %v796 = vunpack.c.l.b16 %v757
      %v797 = vunpack.c.l.b16 %v758
      %v798 = vunpack.c.l.b16 %v759
      %v799 = vunpack.c.l.b16 %v760
      %v800 = vunpack.c.l.b16 %v761
      %v801 = vunpack.c.l.b16 %v762
      %v802 = vunpack.c.l.b16 %v763
      %v803 = vunpack.c.l.b16 %v764
      %v804 = vunpack.c.l.b16 %v765
      %v805 = vunpack.c.l.b16 %v766
      %v806 = vunpack.c.l.b16 %v767
      %v807 = vunpack.c.l.b16 %v768
      %v808 = vunpack.c.l.b16 %v769
      %v809 = vunpack.c.l.b16 %v770
      %v810 = vpack.c.b16 %v795, %v794
      %v811 = vpack.c.b16 %v797, %v796
      %v812 = vpack.c.b16 %v799, %v798
      %v813 = vpack.c.b16 %v801, %v800
      %v814 = vpack.c.b16 %v803, %v802
      %v815 = vpack.c.b16 %v805, %v804
      %v816 = vpack.c.b16 %v807, %v806
      %v817 = vpack.c.b16 %v809, %v808
      %826 = vmatprep.subr.bf16.mxu0 0
      %827 = vmatpush1.bf16.msra.mxu0 %v810
      %828 = vmatprep.subr.bf16.mxu0 0
      %829 = vmatpush1.bf16.msra.mxu0 %v811
      %830 = vmatprep.subr.bf16.mxu0 0
      %831 = vmatpush1.bf16.msra.mxu0 %v812
      %832 = vmatprep.subr.bf16.mxu0 0
      %833 = vmatpush1.bf16.msra.mxu0 %v813
      %834 = vmatprep.subr.bf16.mxu0 0
      %835 = vmatpush1.bf16.msra.mxu0 %v814
      %836 = vmatprep.subr.bf16.mxu0 0
      %837 = vmatpush1.bf16.msra.mxu0 %v815
      %838 = vmatprep.subr.bf16.mxu0 0
      %839 = vmatpush1.bf16.msra.mxu0 %v816
      %840 = vmatprep.subr.bf16.mxu0 0
      %841 = vmatpush1.bf16.msra.mxu0 %v817
      %842 = vmatprep.subr.bf16.mxu0 0
      %843 = vmatpush1.bf16.msra.mxu0 0
      %844 = vmatprep.subr.bf16.mxu0 0
      %845 = vmatpush1.bf16.msra.mxu0 0
      %846 = vmatprep.subr.bf16.mxu0 0
      %847 = vmatpush1.bf16.msra.mxu0 0
      %848 = vmatprep.subr.bf16.mxu0 0
      %849 = vmatpush1.bf16.msra.mxu0 0
      %850 = vmatprep.subr.bf16.mxu0 0
      %851 = vmatpush1.bf16.msra.mxu0 0
      %852 = vmatprep.subr.bf16.mxu0 0
      %853 = vmatpush1.bf16.msra.mxu0 0
      %854 = vmatprep.subr.bf16.mxu0 0
      %855 = vmatpush1.bf16.msra.mxu0 0
      %856 = vmatprep.subr.bf16.mxu0 0
      %857 = vmatpush1.bf16.msra.mxu0 0
      %858 = vmatprep.mubr.bf16.mxu0 0
      %859 = vmatmul.mubr.bf16.gmra.mrb[0].mxu0 %v753
      %v860 = vpop.f32.mrb[0].mxu0
      %v861 = vadd.f32 %v776, %v860
      %v862 = vpop.f32.mrb[0].mxu0
      %v863 = vpop.f32.mrb[0].mxu0
      %v864 = vadd.f32 %v776, %v863
      %v865 = vpop.f32.mrb[0].mxu0
      %866 = vmatprep.mubr.bf16.mxu0 0
      %867 = vmatmul.mubr.bf16.gmra.mrb[0].mxu0 %v754
      %v868 = vpop.f32.mrb[0].mxu0
      %v869 = vadd.f32 %v776, %v868
      %v870 = vpop.f32.mrb[0].mxu0
      %v871 = vpop.f32.mrb[0].mxu0
      %v872 = vadd.f32 %v776, %v871
      %v873 = vpop.f32.mrb[0].mxu0
      %874 = vdwg.mxu0
      %v875 = vadd.f32 %v861, %v864
      %v876 = vadd.f32 %v875, %v869
      %v877 = vadd.f32 %v876, %v872
      %v878 = vrot.slane %v877, 4
      %v879 = vadd.f32 %v877, %v878
      %v880 = vrot.slane %v879, 2
      %v881 = vadd.f32 %v879, %v880
      %v882 = vrot.slane %v881, 1
      %v883 = vadd.f32 %v881, %v882
      %v884 = vmul.f32 %v861, %v861
      %v885 = vmul.f32 %v864, %v864
      %v886 = vmul.f32 %v869, %v869
      %v887 = vmul.f32 %v872, %v872
      %v888 = vadd.f32 %v884, %v885
      %v889 = vadd.f32 %v888, %v886
      %v890 = vadd.f32 %v889, %v887
      %v891 = vrot.slane %v890, 4
      %v892 = vadd.f32 %v890, %v891
      %v893 = vrot.slane %v892, 2
      %v894 = vadd.f32 %v892, %v893
      %v895 = vrot.slane %v894, 1
      %v896 = vadd.f32 %v894, %v895
      %897 = vst [vmem:[%s455] sm:$0xff] %v883
      %898 = vst [vmem:[%s459] sm:$0xff] %v896
      %v899 = vpack.c.bf16 %v864, %v861
      %v900 = vpack.c.bf16 %v872, %v869
      %v903 = vunpack.c.l.b16 %v899
      %v904 = vunpack.c.h.b16 %v899
      %v905 = vunpack.c.l.b16 %v900
      %v906 = vunpack.c.h.b16 %v900
      %v907 = vpack.c.b16 %v903, %v903
      %v908 = vpack.c.b16 %v904, %v904
      %v909 = vpack.c.b16 %v905, %v905
      %v910 = vpack.c.b16 %v906, %v906
      %915 = vst [vmem:[%s450] sm:$0xf] %v907
      %916 = vst [vmem:[%s450 + $0x4] sm:$0xf] %v908
      %917 = vst [vmem:[%s450 + $0x8] sm:$0xf] %v909
      %918 = vst [vmem:[%s450 + $0xc] sm:$0xf] %v910
      %s919 = smul.u32 4, %s24
      %p920 = scmp.lt.s32.totalorder %s919, 7
      %s921 = scalar_select %p920, %s919, 7
      %s922 = smul.addr %s921, 4
      %s923 = scalar_lea.vmem %s10, %s922
      %p924 = scmp.lt.s32.totalorder %s24, 1
      %s925 = scalar_select %p924, %s24, 1
      %s926 = smul.addr %s925, 8
      %s927 = scalar_lea.vmem %s11, %s926
      %p928 = scmp.lt.s32.totalorder %s24, 1
      %s929 = scalar_select %p928, %s24, 1
      %s930 = smul.addr %s929, 8
      %s931 = scalar_lea.vmem %s12, %s930
      // Predicated region
      $region61: #{ialnet_forward.1} parent=59 // pred_check
        %p932 = pneg %p262
      $region62: #{ialnet_forward.1} parent=59 // pred_check_branch
        %934 = sbr.rel (%p932) target = $region64
      $region63: #{ialnet_forward.1} parent=59 // pred_region
        %s935 = smul.u32 4, %s24
      $region64: #{ialnet_forward.1} parent=59 // pred_fallthru
        _
      // Predicated region
      $region65: #{ialnet_forward.1} parent=59 // pred_check
        %p936 = pneg %p288
      $region66: #{ialnet_forward.1} parent=59 // pred_check_branch
        %938 = sbr.rel (%p936) target = $region68
      $region67: #{ialnet_forward.1} parent=59 // pred_region
        _
      $region68: #{ialnet_forward.1} parent=59 // pred_fallthru
        _
      // Predicated region
      $region69: #{ialnet_forward.1} parent=59 // pred_check
        %p939 = pneg %p314
      $region70: #{ialnet_forward.1} parent=59 // pred_check_branch
        %941 = sbr.rel (%p939) target = $region72
      $region71: #{ialnet_forward.1} parent=59 // pred_region
        _
      $region72: #{ialnet_forward.1} parent=59 // pred_fallthru
        _
    $region60: #{ialnet_forward.1} parent=5 // pred_fallthru
      _
    %p942 = scmp.le.s32.totalorder 2, %s19
    // Predicated region
    $region73: #{ialnet_forward.1} parent=5 // pred_check
      %p943 = pneg %p942
    $region74: #{ialnet_forward.1} parent=5 // pred_check_branch
      %945 = sbr.rel (%p943) target = $region76
    $region75: #{ialnet_forward.1} parent=5 // pred_region
      %s946 = ssub.s32 %s19, 2
      // Predicated region
      $region77: #{ialnet_forward.1} parent=75 // pred_check
        %p947 = pneg %p268
      $region78: #{ialnet_forward.1} parent=75 // pred_check_branch
        %949 = sbr.rel (%p947) target = $region80
      $region79: #{ialnet_forward.1} parent=75 // pred_region
        %s950 = smul.u32 4, %s25
        %p951 = scmp.lt.s32.totalorder %s950, 7
        %s952 = scalar_select %p951, %s950, 7
        %s953 = smul.addr %s952, 4
        %s954 = scalar_lea.vmem %s10, %s953
      $region80: #{ialnet_forward.1} parent=75 // pred_fallthru
        _
      // Predicated region
      $region81: #{ialnet_forward.1} parent=75 // pred_check
        %p955 = pneg %p294
      $region82: #{ialnet_forward.1} parent=75 // pred_check_branch
        %957 = sbr.rel (%p955) target = $region84
      $region83: #{ialnet_forward.1} parent=75 // pred_region
        %p958 = scmp.lt.s32.totalorder %s25, 1
        %s959 = scalar_select %p958, %s25, 1
        %s960 = smul.addr %s959, 8
        %s961 = scalar_lea.vmem %s11, %s960
      $region84: #{ialnet_forward.1} parent=75 // pred_fallthru
        _
      // Predicated region
      $region85: #{ialnet_forward.1} parent=75 // pred_check
        %p962 = pneg %p320
      $region86: #{ialnet_forward.1} parent=75 // pred_check_branch
        %964 = sbr.rel (%p962) target = $region88
      $region87: #{ialnet_forward.1} parent=75 // pred_region
        %p965 = scmp.lt.s32.totalorder %s25, 1
        %s966 = scalar_select %p965, %s25, 1
        %s967 = smul.addr %s966, 8
        %s968 = scalar_lea.vmem %s12, %s967
      $region88: #{ialnet_forward.1} parent=75 // pred_fallthru
        _
    $region76: #{ialnet_forward.1} parent=5 // pred_fallthru
      _
  $region6: #{ialnet_forward.1} parent=0 // loop_footer
    %s23 = sadd.s32 1, %s19
  $region7: #{ialnet_forward.1} parent=0 // loop_footer_branch
    %18 = sbr.rel target = $region3
  $region8: #{ialnet_forward.1} parent=0 // loop_exit
    _

</llo_original>
